<compile_context>
chip_gen: v6e
topology: v6e:2x2x1
jax: 0.10.0
libtpu: 0.0.40
codegen_flags: <defaults>
</compile_context>

<pallas_src>
import numpy as np
import jax
import jax.numpy as jnp
from jax.experimental import pallas as pl
from jax.experimental.pallas import tpu as pltpu


def _scene_segments(num_agents, num_encodings, num_scenes):
    """Mirror the sequential scene walk in SpatialPoolAgent.forward and compress
    it to a per-scene [start, count] table (membership is contiguous because the
    walk is monotone in scene_idx)."""
    sids = []
    scene_idx = 0
    agent_in_scene_idx = 0
    for _ in range(num_encodings):
        if scene_idx >= len(num_agents) or scene_idx >= num_scenes:
            raise ValueError(
                "num_agents does not cover all agent encodings "
                f"(ran out at scene {scene_idx} after assigning {len(sids)} of "
                f"{num_encodings} agents)")
        sids.append(scene_idx)
        agent_in_scene_idx += 1
        if agent_in_scene_idx >= int(num_agents[scene_idx]):
            scene_idx += 1
            agent_in_scene_idx = 0
    sids = np.asarray(sids, dtype=np.int32)

    seg = np.zeros((num_scenes, 2), dtype=np.int32)   # [start, count] per scene
    for b in range(num_scenes):
        members = np.nonzero(sids == b)[0]
        if members.size:
            seg[b, 0] = members[0]
            seg[b, 1] = members.size
    return seg


def _pool_kernel(seg_ref, enc_t_ref, grid_ref, out_ref):
    # seg_ref  : SMEM (B, 2) int32   -- [start, count] of agents for each scene
    # enc_t_ref: VMEM (C, K)         -- agent encodings, transposed (C on sublanes)
    # grid_ref : VMEM (1, C, L)      -- corner tile of scene b (flattened H*W on lanes)
    # out_ref  : VMEM (1, C, L)      -- aliased to the grid in HBM
    b = pl.program_id(0)
    start = seg_ref[b, 0]
    count = seg_ref[b, 1]

    enc_t = enc_t_ref[...]                                     # (C, K)
    if jnp.issubdtype(enc_t.dtype, jnp.floating):
        neg = -jnp.inf
    else:
        neg = jnp.iinfo(enc_t.dtype).min                        # int-safe mask value

    # Mask agents outside this scene, then lane-reduce over K.
    col = jax.lax.broadcasted_iota(jnp.int32, enc_t.shape, 1)   # (C, K)
    in_scene = (col >= start) & (col < start + count)
    masked = jnp.where(in_scene, enc_t, neg)
    seg_max = jnp.max(masked, axis=1, keepdims=True)            # (C, 1); empty scene -> neg

    tile = grid_ref[...]                                        # (1, C, L)
    seg_max_b = seg_max[None].astype(tile.dtype)                # (1, C, 1), lane-broadcasts
    lane = jax.lax.broadcasted_iota(jnp.int32, tile.shape, 2)
    pooled = jnp.maximum(tile, seg_max_b)
    # Only lane 0 (flattened (h=0, w=0)) is updated; the rest of the small tile
    # is written back unchanged.  Everything outside this tile is preserved by
    # the input->output alias and never moves through VMEM.
    out_ref[...] = jnp.where(lane == 0, pooled, tile)


def spatial_pool_agent(input_grid, agent_encodings, encode_coordinates, num_agents):
    """Pallas forward pass of SpatialPoolAgent.

    input_grid         : (B, C, H, W)  scene grids (NCHW, PyTorch layout)
    agent_encodings    : (K, C)        per-agent encodings
    encode_coordinates : (K, 2)        unused (transform_coordinates() -> (0, 0))
    num_agents         : host-side sequence of per-scene agent counts
    """
    del encode_coordinates  # transform_coordinates() always maps to (0, 0)

    B, C, H, W = input_grid.shape
    K = agent_encodings.shape[0]
    HW = H * W
    # Lane tile containing the (h=0, w=0) corner: 128 lanes keeps the block
    # (8,128)-legal and the store lane-dense; tiny spatial grids use HW whole.
    L = 128 if HW >= 128 else HW

    seg = jnp.asarray(_scene_segments(num_agents, K, B))         # (B, 2) int32
    # Tiny (K*C) transpose so C sits on sublanes inside the kernel; the segment
    # max then matches the layout of the grid corner column with no relayout.
    enc_t = jnp.transpose(agent_encodings, (1, 0))                # (C, K)

    # NCHW -> (B, C, H*W): contiguous reshape, no data movement. Corner = flat index 0.
    grid_flat = input_grid.reshape(B, C, HW)

    out_flat = pl.pallas_call(
        _pool_kernel,
        out_shape=jax.ShapeDtypeStruct((B, C, HW), input_grid.dtype),
        grid_spec=pl.GridSpec(
            grid=(B,),
            in_specs=[
                pl.BlockSpec(memory_space=pltpu.MemorySpace.SMEM),   # seg table
                pl.BlockSpec((C, K), lambda b: (0, 0)),              # enc^T (fetched once)
                pl.BlockSpec((1, C, L), lambda b: (b, 0, 0)),        # corner tile only
            ],
            out_specs=pl.BlockSpec((1, C, L), lambda b: (b, 0, 0)),
        ),
        # Output buffer == grid buffer: only the B corner tiles are RMW'd; the
        # rest of the grid is preserved through the alias.
        input_output_aliases={2: 0},
        compiler_params=pltpu.CompilerParams(
            dimension_semantics=("parallel",),   # scenes independent; v7x gets both TCs
        ),
    )(seg, enc_t, grid_flat)

    return out_flat.reshape(B, C, H, W)


def _reference_numpy(input_grid, agent_encodings, num_agents):
    """Direct transcription of the PyTorch forward for verification."""
    grid = np.array(input_grid, dtype=np.float32)
    enc = np.array(agent_encodings, dtype=np.float32)
    scene_idx = 0
    agent_in_scene_idx = 0
    for k in range(enc.shape[0]):
        ori = grid[scene_idx, :, 0, 0].copy()
        grid[scene_idx, :, 0, 0] = np.maximum(ori, enc[k, :])
        agent_in_scene_idx += 1
        if agent_in_scene_idx >= int(num_agents[scene_idx]):
            scene_idx += 1
            agent_in_scene_idx = 0
    return grid


if __name__ == "__main__":
    encoding_dim = 32           # C (== SpatialPoolAgent encoding_dim)
    B, H, W = 2, 16, 16         # scenes, spatial grid
    K = 8                       # total agents
    num_agents = [5, 3]         # per-scene agent counts (sums to K)

    key = jax.random.PRNGKey(0)
    k1, k2, k3 = jax.random.split(key, 3)
    input_grid = jax.random.normal(k1, (B, encoding_dim, H, W), dtype=jnp.float32)
    agent_encodings = jax.random.normal(k2, (K, encoding_dim), dtype=jnp.float32)
    encode_coordinates = jax.random.normal(k3, (K, 2), dtype=jnp.float32)  # unused

    expected = _reference_numpy(np.asarray(input_grid),
                                np.asarray(agent_encodings), num_agents)

    out = spatial_pool_agent(input_grid, agent_encodings, encode_coordinates, num_agents)
    out = jax.block_until_ready(out)

    np.testing.assert_allclose(np.asarray(out), expected, rtol=1e-6, atol=1e-6)
    print("KERNEL_OK")
</pallas_src>

<mosaic_0001>
module attributes {stable_mosaic.version = 11 : i64} {
  func.func @_pool_kernel(%arg0: i32, %arg1: memref<2x2xi32, #tpu.memory_space<smem>>, %arg2: memref<32x8xf32, #tpu.memory_space<vmem>>, %arg3: memref<1x32x128xf32, #tpu.memory_space<vmem>>, %arg4: memref<1x32x128xf32, #tpu.memory_space<vmem>>) attributes {dimension_semantics = [#tpu.dimension_semantics<parallel>], iteration_bounds = array<i64: 2>, scalar_prefetch = 0 : i64, scratch_operands = 0 : i64, tpu.core_type = #tpu.core_type<tc>, window_params = [{transform_indices = @transform_0, window_bounds = array<i64: 2, 2>}, {pipeline_mode = #tpu.pipeline_mode<synchronous>, transform_indices = @transform_1, window_bounds = array<i64: 32, 8>}, {transform_indices = @transform_2, window_bounds = array<i64: 1, 32, 128>}, {transform_indices = @transform_3, window_bounds = array<i64: 1, 32, 128>}]} {
    %0 = arith.index_cast %arg0 : i32 to index
    %c0 = arith.constant 0 : index
    %1 = memref.load %arg1[%0, %c0] : memref<2x2xi32, #tpu.memory_space<smem>>
    %2 = arith.index_cast %arg0 : i32 to index
    %c1 = arith.constant 1 : index
    %3 = memref.load %arg1[%2, %c1] : memref<2x2xi32, #tpu.memory_space<smem>>
    %c0_0 = arith.constant 0 : index
    %c0_1 = arith.constant 0 : index
    %4 = vector.load %arg2[%c0_0, %c0_1] : memref<32x8xf32, #tpu.memory_space<vmem>>, vector<32x8xf32>
    %5 = tpu.iota {dimensions = array<i32: 1>} : vector<32x8xi32>
    %6 = vector.broadcast %1 : i32 to vector<32x8xi32>
    %7 = arith.cmpi sge, %5, %6 : vector<32x8xi32>
    %8 = arith.addi %1, %3 : i32
    %9 = vector.broadcast %8 : i32 to vector<32x8xi32>
    %10 = arith.cmpi slt, %5, %9 : vector<32x8xi32>
    %11 = arith.andi %7, %10 : vector<32x8xi1>
    %cst = arith.constant 0xFF800000 : f32
    %12 = vector.broadcast %cst : f32 to vector<32x8xf32>
    %13 = arith.select %11, %4, %12 : vector<32x8xi1>, vector<32x8xf32>
    %cst_2 = arith.constant dense<0xFF800000> : vector<32xf32>
    %14 = vector.multi_reduction <maximumf>, %13, %cst_2 [1] : vector<32x8xf32> to vector<32xf32>
    %15 = vector.shape_cast %14 : vector<32xf32> to vector<32x1xf32>
    %c0_3 = arith.constant 0 : index
    %c0_4 = arith.constant 0 : index
    %c0_5 = arith.constant 0 : index
    %16 = vector.load %arg3[%c0_3, %c0_4, %c0_5] : memref<1x32x128xf32, #tpu.memory_space<vmem>>, vector<1x32x128xf32>
    %17 = vector.shape_cast %15 : vector<32x1xf32> to vector<1x32x1xf32>
    %18 = tpu.iota {dimensions = array<i32: 2>} : vector<1x32x128xi32>
    %19 = vector.broadcast %17 : vector<1x32x1xf32> to vector<1x32x128xf32>
    %20 = arith.maximumf %16, %19 : vector<1x32x128xf32>
    %c0_i32 = arith.constant 0 : i32
    %21 = vector.broadcast %c0_i32 : i32 to vector<1x32x128xi32>
    %22 = arith.cmpi eq, %18, %21 : vector<1x32x128xi32>
    %23 = arith.select %22, %20, %16 : vector<1x32x128xi1>, vector<1x32x128xf32>
    %c0_6 = arith.constant 0 : index
    %c0_7 = arith.constant 0 : index
    %c0_8 = arith.constant 0 : index
    %24 = vector.load %arg4[%c0_6, %c0_7, %c0_8] : memref<1x32x128xf32, #tpu.memory_space<vmem>>, vector<1x32x128xf32>
    tpu.vector_store %arg4[%c0_6, %c0_7, %c0_8], %23 {strides = array<i32>} : memref<1x32x128xf32, #tpu.memory_space<vmem>>, vector<1x32x128xf32>,
    return
  }
  func.func @transform_0(%arg0: i32) -> (i32, i32) {
    %c0_i32 = arith.constant 0 : i32
    %c0_i32_0 = arith.constant 0 : i32
    %c0_i32_1 = arith.constant 0 : i32
    return %c0_i32, %c0_i32_0 : i32, i32
  }
  func.func @transform_1(%arg0: i32) -> (i32, i32) {
    %c0_i32 = arith.constant 0 : i32
    %c0_i32_0 = arith.constant 0 : i32
    %c0_i32_1 = arith.constant 0 : i32
    return %c0_i32, %c0_i32_0 : i32, i32
  }
  func.func @transform_2(%arg0: i32) -> (i32, i32, i32) {
    %c0_i32 = arith.constant 0 : i32
    %c0_i32_0 = arith.constant 0 : i32
    %c0_i32_1 = arith.constant 0 : i32
    return %arg0, %c0_i32, %c0_i32_0 : i32, i32, i32
  }
  func.func @transform_3(%arg0: i32) -> (i32, i32, i32) {
    %c0_i32 = arith.constant 0 : i32
    %c0_i32_0 = arith.constant 0 : i32
    %c0_i32_1 = arith.constant 0 : i32
    return %arg0, %c0_i32, %c0_i32_0 : i32, i32, i32
  }
}

</mosaic_0001>

<llo_original>
// kernel: tpu_custom_call.1
$region0: #{tpu_custom_call.1}
  #allocation0 [shape = 'u32[]', space=smem, size = 0x4, offset = 0x4, fixed_abs, tag = 'smem constant byte address 0x4 - core index']
  #allocation1 [shape = 'u32[144,128]{1,0:T(1,128)}', space=vmem, size = 0x12000, scoped, tag = 'internal scratch']
  %s0 = inlined_call_operand.vmem [shape: s32[2,2], index: 0, kind: input, shape index: {}]
  %s1 = inlined_call_operand.vmem [shape: f32[32,8], index: 1, kind: input, shape index: {}]
  %s2 = inlined_call_operand.hbm [shape: f32[2,32,256], index: 2, kind: input, shape index: {}, may-alias: {2,3}]
  %s3 = inlined_call_operand.hbm [shape: f32[2,32,256], index: 3, kind: output, shape index: {}, may-alias: {2,3}]
  %s4 = sld [smem:[#allocation0]]
  $region53: #{tpu_custom_call.1} parent=0
    _
  %s6 = ssub.s32 1, %s4
  %s7 = scalar_select 0, %s6, %s4
  $region1: #{tpu_custom_call.1} parent=0
    #allocation2 [shape = 'u8[1024]{0}', space=smem, size = 0x400, scoped, tag = 'input window, operand 0, single buffered']
    #allocation3 [shape = 's32[2]{0}', space=sflag, size = 0x8, scoped, tag = 'scoped memory for tpu_custom_call.1']
    #allocation4 [shape = 's32[2]{0}', space=sflag, size = 0x8, scoped, tag = 'scoped memory for tpu_custom_call.1']
    #allocation5 [shape = 's32[2]{0}', space=sflag, size = 0x8, scoped, tag = 'scoped memory for tpu_custom_call.1']
    #allocation6 [shape = 'u8[32768]{0}', space=vmem, size = 0x8000, scoped, tag = 'input window, operand 2']
    #allocation7 [shape = 'u8[32768]{0}', space=vmem, size = 0x8000, scoped, tag = 'output window, operand 0']
    %8 = vsyncpa [#allocation5], 0
    %9 = vsyncpa [#allocation3], 0
    %s10 = scalar_lea.sflag [#allocation3], 1
    %11 = vsyncpa %s10, 0
    %12 = vsyncpa [#allocation4], 0
    %s13 = scalar_lea.sflag [#allocation4], 1
    %14 = vsyncpa %s13, 0
    loop: start=0, step=1, limit=4
    $region2: #{tpu_custom_call.1} parent=1 // loop_pre_header
      _
    $region3: #{tpu_custom_call.1} parent=1 // loop_header
      %s16 = sphi 0, %s20
      %p17 = scmp.ge.s32.totalorder %s16, 4
      %s24 = sphi 0, %s24
      %s26 = sphi 0, %s24
      %s27 = sphi 0, %s26
      %s41 = sphi 0, %s27
      %s45 = sphi 0, %s45
      %s47 = sphi 0, %s45
      %s48 = sphi 0, %s47
      %s62 = sphi 0, %s48
      %s68 = sphi 0, %s70
      %s71 = sphi 0, %s68
      %s72 = sphi 0, %s71
      %s88 = sphi 0, %s72
      %s94 = sphi 0, %s96
      %s97 = sphi 0, %s94
      %s98 = sphi 0, %s97
      %s114 = sphi 0, %s98
    $region4: #{tpu_custom_call.1} parent=1 // loop_header_branch
      %19 = sbr.rel (%p17) target = $region8
    $region5: #{tpu_custom_call.1} parent=1 // loop_body
      %s21 = ssub.s32 %s16, 1
      %s22 = ssub.s32 %s16, 2
      %s23 = sadd.s32 %s16, 1
      %s25 = sadd.s32 %s24, 1
      %p28 = scmp.eq.s32.totalorder %s16, 1
      %p29 = scmp.ne.s32.totalorder %s24, %s26
      %p30 = scmp.eq.s32.totalorder %s16, 0
      %p31 = por %p29, %p30
      %p32 = scmp.ne.s32.totalorder %s24, %s26
      %p33 = scmp.eq.s32.totalorder %s21, 1
      %p34 = por %p32, %p33
      %p35 = scmp.ne.s32.totalorder %s26, %s27
      %p36 = scmp.eq.s32.totalorder %s21, 0
      %p37 = por %p35, %p36
      %p38 = scmp.ne.s32.totalorder %s26, %s27
      %p39 = scmp.eq.s32.totalorder %s22, 1
      %p40 = por %p38, %p39
      %p42 = scmp.ne.s32.totalorder %s27, %s41
      %p43 = scmp.eq.s32.totalorder %s22, 0
      %p44 = por %p42, %p43
      %s46 = sadd.s32 %s45, 1
      %p49 = scmp.eq.s32.totalorder %s16, 1
      %p50 = scmp.ne.s32.totalorder %s45, %s47
      %p51 = scmp.eq.s32.totalorder %s16, 0
      %p52 = por %p50, %p51
      %p53 = scmp.ne.s32.totalorder %s45, %s47
      %p54 = scmp.eq.s32.totalorder %s21, 1
      %p55 = por %p53, %p54
      %p56 = scmp.ne.s32.totalorder %s47, %s48
      %p57 = scmp.eq.s32.totalorder %s21, 0
      %p58 = por %p56, %p57
      %p59 = scmp.ne.s32.totalorder %s47, %s48
      %p60 = scmp.eq.s32.totalorder %s22, 1
      %p61 = por %p59, %p60
      %p63 = scmp.ne.s32.totalorder %s48, %s62
      %p64 = scmp.eq.s32.totalorder %s22, 0
      %p65 = por %p63, %p64
      %s66 = ssub.s32 %s16, %s23
      %p67 = scmp.eq.s32.totalorder %s66, 0
      %s69 = sadd.s32 %s68, 1
      %s70 = scalar_select %p67, %s68, %s69
      %p73 = pneg %p67
      %p74 = scmp.eq.s32.totalorder %s16, 1
      %p75 = por %p73, %p74
      %p76 = scmp.ne.s32.totalorder %s68, %s71
      %p77 = scmp.eq.s32.totalorder %s16, 0
      %p78 = por %p76, %p77
      %p79 = scmp.ne.s32.totalorder %s68, %s71
      %p80 = scmp.eq.s32.totalorder %s21, 1
      %p81 = por %p79, %p80
      %p82 = scmp.ne.s32.totalorder %s71, %s72
      %p83 = scmp.eq.s32.totalorder %s21, 0
      %p84 = por %p82, %p83
      %p85 = scmp.ne.s32.totalorder %s71, %s72
      %p86 = scmp.eq.s32.totalorder %s22, 1
      %p87 = por %p85, %p86
      %p89 = scmp.ne.s32.totalorder %s72, %s88
      %p90 = scmp.eq.s32.totalorder %s22, 0
      %p91 = por %p89, %p90
      %s92 = ssub.s32 %s16, %s23
      %p93 = scmp.eq.s32.totalorder %s92, 0
      %s95 = sadd.s32 %s94, 1
      %s96 = scalar_select %p93, %s94, %s95
      %p99 = pneg %p93
      %p100 = scmp.eq.s32.totalorder %s16, 1
      %p101 = por %p99, %p100
      %p102 = scmp.ne.s32.totalorder %s94, %s97
      %p103 = scmp.eq.s32.totalorder %s16, 0
      %p104 = por %p102, %p103
      %p105 = scmp.ne.s32.totalorder %s94, %s97
      %p106 = scmp.eq.s32.totalorder %s21, 1
      %p107 = por %p105, %p106
      %p108 = scmp.ne.s32.totalorder %s97, %s98
      %p109 = scmp.eq.s32.totalorder %s21, 0
      %p110 = por %p108, %p109
      %p111 = scmp.ne.s32.totalorder %s97, %s98
      %p112 = scmp.eq.s32.totalorder %s22, 1
      %p113 = por %p111, %p112
      %p115 = scmp.ne.s32.totalorder %s98, %s114
      %p116 = scmp.eq.s32.totalorder %s22, 0
      %p117 = por %p115, %p116
      %p118 = scmp.le.s32.totalorder 1, %s16
      %p119 = scmp.lt.s32.totalorder %s16, 3
      %p120 = pnand %p118, %p119
      %p121 = pneg %p120
      // Predicated region
      $region9: #{tpu_custom_call.1} parent=5 // pred_check
        _
      $region10: #{tpu_custom_call.1} parent=5 // pred_check_branch
        %123 = sbr.rel (%p120) target = $region12
      $region11: #{tpu_custom_call.1} parent=5 // pred_region
        %s124 = ssub.s32 %s16, 1
        // Predicated region
        $region13: #{tpu_custom_call.1} parent=11 // pred_check
          %p125 = pneg %p37
        $region14: #{tpu_custom_call.1} parent=11 // pred_check_branch
          %127 = sbr.rel (%p125) target = $region16
        $region15: #{tpu_custom_call.1} parent=11 // pred_region
          %s129 = ssub.s32 32, 32
          %130 = vsyncadd [#allocation5], %s129
          %s132 = sshll.u32 %s0, 4
          %s133 = int_to_ptr.vmem [resolvable:$true] %s132
          %135 = dma.vmem_to_smem %s133, 32, [#allocation2], [#allocation5]
        $region16: #{tpu_custom_call.1} parent=11 // pred_fallthru
          _
        // Predicated region
        $region17: #{tpu_custom_call.1} parent=11 // pred_check
          %p136 = pneg %p58
        $region18: #{tpu_custom_call.1} parent=11 // pred_check_branch
          %138 = sbr.rel (%p136) target = $region20
        $region19: #{tpu_custom_call.1} parent=11 // pred_region
          _
        $region20: #{tpu_custom_call.1} parent=11 // pred_fallthru
          _
      $region12: #{tpu_custom_call.1} parent=5 // pred_fallthru
        _
      %p139 = scmp.lt.s32.totalorder %s16, 2
      // Predicated region
      $region21: #{tpu_custom_call.1} parent=5 // pred_check
        %p140 = pneg %p139
      $region22: #{tpu_custom_call.1} parent=5 // pred_check_branch
        %142 = sbr.rel (%p140) target = $region24
      $region23: #{tpu_custom_call.1} parent=5 // pred_region
        // Predicated region
        $region25: #{tpu_custom_call.1} parent=23 // pred_check
          %p143 = pneg %p78
        $region26: #{tpu_custom_call.1} parent=23 // pred_check_branch
          %145 = sbr.rel (%p143) target = $region28
        $region27: #{tpu_custom_call.1} parent=23 // pred_region
          %s146 = sand.u32 %s68, 1
          %s147 = scalar_lea.sflag [#allocation3], %s146
          %s148 = sand.u32 %s68, 1
          %s149 = smul.addr %s148, 32
          %s150 = scalar_lea.vmem [#allocation6], %s149
          %s152 = ssub.s32 512, 512
          %153 = vsyncadd %s147, %s152
          %s154 = smul.addr %s16, 8
          %s155 = smul.addr %s154, 128
          %s156 = scalar_lea.hbm %s2, %s155
          %s157 = sshll.u32 %s150, 4
          %s158 = int_to_ptr.vmem [resolvable:$true] %s157
          %163 = dma.hbm_to_vmem [thread:$0]  %s156, 512, %s158, %s147, 256, 128, 8
        $region28: #{tpu_custom_call.1} parent=23 // pred_fallthru
          _
      $region24: #{tpu_custom_call.1} parent=5 // pred_fallthru
        _
      %p164 = scmp.le.s32.totalorder 1, %s16
      %p165 = scmp.lt.s32.totalorder %s16, 3
      %p166 = pnand %p164, %p165
      %p167 = pneg %p166
      // Predicated region
      $region29: #{tpu_custom_call.1} parent=5 // pred_check
        _
      $region30: #{tpu_custom_call.1} parent=5 // pred_check_branch
        %169 = sbr.rel (%p166) target = $region32
      $region31: #{tpu_custom_call.1} parent=5 // pred_region
        %s170 = ssub.s32 %s16, 1
        // Predicated region
        $region33: #{tpu_custom_call.1} parent=31 // pred_check
          %p171 = pneg %p37
        $region34: #{tpu_custom_call.1} parent=31 // pred_check_branch
          %173 = sbr.rel (%p171) target = $region36
        $region35: #{tpu_custom_call.1} parent=31 // pred_region
          %174 = dma.done [#allocation5], 32
        $region36: #{tpu_custom_call.1} parent=31 // pred_fallthru
          _
        %s175 = sand.u32 %s71, 1
        %s176 = scalar_lea.sflag [#allocation3], %s175
        %s177 = sand.u32 %s71, 1
        %s178 = smul.addr %s177, 32
        %s179 = scalar_lea.vmem [#allocation6], %s178
        // Predicated region
        $region37: #{tpu_custom_call.1} parent=31 // pred_check
          %p180 = pneg %p84
        $region38: #{tpu_custom_call.1} parent=31 // pred_check_branch
          %182 = sbr.rel (%p180) target = $region40
        $region39: #{tpu_custom_call.1} parent=31 // pred_region
          %183 = dma.done %s176, 512
        $region40: #{tpu_custom_call.1} parent=31 // pred_fallthru
          _
        %184 = sfence
        %p185 = pneg %p37
        %p186 = pneg %p34
        %p187 = pneg %p58
        %p188 = pneg %p55
        %s189 = sand.u32 %s71, 1
        %s190 = scalar_lea.sflag [#allocation3], %s189
        %s191 = sand.u32 %s71, 1
        %s192 = smul.addr %s191, 32
        %s193 = scalar_lea.vmem [#allocation6], %s192
        %p194 = pneg %p84
        %p195 = pneg %p81
        %p196 = pneg %p110
        %p197 = pneg %p107
        %s198 = sand.u32 %s97, 1
        %s199 = scalar_lea.sflag [#allocation4], %s198
        %s200 = sand.u32 %s97, 1
        %s201 = smul.addr %s200, 32
        %s202 = scalar_lea.vmem [#allocation7], %s201
        %s203 = smul.u32 %s21, 128
        %s204 = sld [smem:[#allocation2 + %s203]]
        %s205 = sadd.s32 %s203, 1
        %s206 = sld [smem:[#allocation2 + %s205]]
        %v207 = vld [vmem:[%s1] sm:$0xff]
        %v208 = vld [vmem:[%s1 + $0x8] sm:$0xff]
        %v209 = vld [vmem:[%s1 + $0x10] sm:$0xff]
        %v210 = vld [vmem:[%s1 + $0x18] sm:$0xff]
        %v211 = vlaneseq
        %v212 = vand.u32 %v211, 127
        %v213 = vstv %s204
        %vm214 = vcmp.ge.s32.totalorder %v212, %v213
        %s215 = sadd.s32 %s204, %s206
        %v216 = vstv %s215
        %vm217 = vcmp.lt.s32.totalorder %v212, %v216
        %vm218 = vmand %vm214, %vm217
        %v219 = vsel %vm218, %v207, -inf
        %v220 = vsel %vm218, %v208, -inf
        %v221 = vsel %vm218, %v209, -inf
        %v222 = vsel %vm218, %v210, -inf
        %vm223 = vcmask 64512
        %v224 = vsel %vm223, %v219, -inf
        %225 = vmax.xlane.f32.xlu0 %v224
        %v226 = vpop.xlane.xlu0 %225
        %v227 = vsel %vm223, %v220, -inf
        %228 = vmax.xlane.f32.xlu0 %v227
        %v229 = vpop.xlane.xlu0 %228
        %v230 = vsel %vm223, %v221, -inf
        %231 = vmax.xlane.f32.xlu0 %v230
        %v232 = vpop.xlane.xlu0 %231
        %v233 = vsel %vm223, %v222, -inf
        %234 = vmax.xlane.f32.xlu0 %v233
        %v235 = vpop.xlane.xlu0 %234
        %v236 = vld [vmem:[%s179] sm:$0xff]
        %v237 = vld [vmem:[%s179 + $0x8] sm:$0xff]
        %v238 = vld [vmem:[%s179 + $0x10] sm:$0xff]
        %v239 = vld [vmem:[%s179 + $0x18] sm:$0xff]
        %v240 = vmax.f32 %v236, %v226
        %v241 = vmax.f32 %v237, %v229
        %v242 = vmax.f32 %v238, %v232
        %v243 = vmax.f32 %v239, %v235
        %vm244 = vcmp.eq.s32.totalorder %v212, 0
        %v245 = vsel %vm244, %v240, %v236
        %v246 = vsel %vm244, %v241, %v237
        %v247 = vsel %vm244, %v242, %v238
        %v248 = vsel %vm244, %v243, %v239
        %249 = vst [vmem:[%s202] sm:$0xff] %v245
        %250 = vst [vmem:[%s202 + $0x8] sm:$0xff] %v246
        %251 = vst [vmem:[%s202 + $0x10] sm:$0xff] %v247
        %252 = vst [vmem:[%s202 + $0x18] sm:$0xff] %v248
        %s253 = sand.u32 %s97, 1
        %s254 = scalar_lea.sflag [#allocation4], %s253
        %s255 = sand.u32 %s97, 1
        %s256 = smul.addr %s255, 32
        %s257 = scalar_lea.vmem [#allocation7], %s256
        // Predicated region
        $region41: #{tpu_custom_call.1} parent=31 // pred_check
          %p258 = pneg %p107
        $region42: #{tpu_custom_call.1} parent=31 // pred_check_branch
          %260 = sbr.rel (%p258) target = $region44
        $region43: #{tpu_custom_call.1} parent=31 // pred_region
          %s262 = ssub.s32 512, 512
          %263 = vsyncadd %s254, %s262
          %s264 = smul.addr %s21, 8
          %s265 = smul.addr %s264, 128
          %s266 = scalar_lea.hbm %s3, %s265
          %s267 = sshll.u32 %s257, 4
          %s268 = int_to_ptr.vmem [resolvable:$true] %s267
          %273 = dma.vmem_to_hbm [thread:$0]  %s268, 512, %s266, %s254, 128, 256, 8
        $region44: #{tpu_custom_call.1} parent=31 // pred_fallthru
          _
      $region32: #{tpu_custom_call.1} parent=5 // pred_fallthru
        _
      %p274 = scmp.le.s32.totalorder 2, %s16
      // Predicated region
      $region45: #{tpu_custom_call.1} parent=5 // pred_check
        %p275 = pneg %p274
      $region46: #{tpu_custom_call.1} parent=5 // pred_check_branch
        %277 = sbr.rel (%p275) target = $region48
      $region47: #{tpu_custom_call.1} parent=5 // pred_region
        %s278 = ssub.s32 %s16, 2
        // Predicated region
        $region49: #{tpu_custom_call.1} parent=47 // pred_check
          %p279 = pneg %p113
        $region50: #{tpu_custom_call.1} parent=47 // pred_check_branch
          %281 = sbr.rel (%p279) target = $region52
        $region51: #{tpu_custom_call.1} parent=47 // pred_region
          %s282 = sand.u32 %s98, 1
          %s283 = scalar_lea.sflag [#allocation4], %s282
          %s284 = sand.u32 %s98, 1
          %s285 = smul.addr %s284, 32
          %s286 = scalar_lea.vmem [#allocation7], %s285
          %287 = dma.done %s283, 512
        $region52: #{tpu_custom_call.1} parent=47 // pred_fallthru
          _
      $region48: #{tpu_custom_call.1} parent=5 // pred_fallthru
        _
    $region6: #{tpu_custom_call.1} parent=1 // loop_footer
      %s20 = sadd.s32 1, %s16
    $region7: #{tpu_custom_call.1} parent=1 // loop_footer_branch
      %15 = sbr.rel target = $region3
    $region8: #{tpu_custom_call.1} parent=1 // loop_exit
      _
    %288 = vsyncpa [#allocation3], 1
    %s289 = scalar_lea.sflag [#allocation3], 1
    %290 = vsyncpa %s289, 1
    %291 = vsyncpa [#allocation4], 1
    %s292 = scalar_lea.sflag [#allocation4], 1
    %293 = vsyncpa %s292, 1
    %294 = vsyncpa [#allocation5], 1
    %s295 = scalar_lea.sflag [#allocation5], 1
    %296 = vsyncpa %s295, 1

</llo_original>
